<compile_context>
chip_gen: v5e
topology: v5e:2x2
jax: 0.10.0
libtpu: 0.0.40
codegen_flags: <defaults>
</compile_context>

<pallas_src>
import numpy as np

import jax
import jax.numpy as jnp
from jax import lax
from jax.experimental import pallas as pl
from jax.experimental.pallas import tpu as pltpu

_LANES = 128
_H1 = 64
_H2 = 32


def _round_up(v, m):
    return ((v + m - 1) // m) * m


def _net_kernel(x_ref, gid_ref, w1_ref, b1_ref, w2_ref, b2_ref, wc_ref,
                out_ref, acc_ref):
    t = pl.program_id(1)

    @pl.when(t == 0)
    def _():
        acc_ref[...] = jnp.zeros_like(acc_ref)

    # Two-layer MLP on this row tile: bf16 MXU operands, f32 accumulation and
    # f32 elementwise (bias, ReLU).
    x = x_ref[...]                                                    # [TM, F] bf16
    h1 = jnp.dot(x, w1_ref[...], preferred_element_type=jnp.float32) + b1_ref[...]
    h1 = jnp.maximum(h1, 0.0)
    h2 = jnp.dot(h1.astype(jnp.bfloat16), w2_ref[...],
                 preferred_element_type=jnp.float32) + b2_ref[...]
    h2 = jnp.maximum(h2, 0.0)                                         # [TM, 32] f32

    # Lane-dense [G, TM] one-hot membership mask (gid == -1 marks padded rows,
    # so they never match any group); bf16 MXU segment-sum into [G, 32] f32.
    tm = h2.shape[0]
    g_pad = acc_ref.shape[0]
    gid = gid_ref[...]                                                # [1, TM] int32
    one_hot = (gid == lax.broadcasted_iota(jnp.int32, (g_pad, tm), 0)
               ).astype(jnp.bfloat16)                                 # [G, TM]
    acc_ref[...] += jnp.dot(one_hot, h2.astype(jnp.bfloat16),
                            preferred_element_type=jnp.float32)       # [G, 32]

    @pl.when(t == pl.num_programs(1) - 1)
    def _():
        # Deferred classifier: one [G,32]@[32,c_pad] matmul per core.
        # 1/group_size scaling and the classifier bias are applied in f32 on
        # the tiny [G, C] result outside the kernel (after the 2-core sum).
        out_ref[0, :, :] = jnp.dot(acc_ref[...].astype(jnp.bfloat16), wc_ref[...],
                                   preferred_element_type=jnp.float32)


def net_forward(x, params, group_list, aggregate_mode="average", *, tm=2048):
    """x: [N, in_feats] float32. Returns [len(group_list), n_classes] float32."""
    if aggregate_mode != "average":
        raise NotImplementedError(
            "Only Aggregate_mode='average' is implemented (see TODO above).")
    if any(int(s) <= 0 for s in group_list):
        raise ValueError("group_list entries must be positive")

    w1, b1, w2, b2, wc, bc = params
    n_rows, in_feats = x.shape
    n_groups = len(group_list)
    n_classes = wc.shape[1]
    if sum(int(s) for s in group_list) != n_rows:
        raise ValueError("group_list sizes must sum to number of rows")

    g_pad = max(8, _round_up(n_groups, 8))
    c_pad = _round_up(n_classes, _LANES)

    # --- Row-tile sizing: multiple of 128 (keeps x tile sublane-aligned and
    # the [1, tm] group-id tile lane-aligned), clamped by a VMEM budget for the
    # double-buffered row tiles that also fits v7x's 64 MiB VMEM.
    bytes_per_row = in_feats * 2 + 4                     # bf16 x + int32 gid
    row_budget = 24 * 1024 * 1024
    tm_cap = max(_LANES, row_budget // (2 * bytes_per_row))
    tm = min(int(tm), int(tm_cap))
    tm = max(_LANES, (tm // _LANES) * _LANES)
    rows_per_core = _round_up(pl.cdiv(n_rows, 2), _LANES)
    tm = min(tm, rows_per_core)
    n_half = pl.cdiv(n_rows, 2 * tm)                     # row tiles per core
    n_pad = 2 * n_half * tm

    # Host-side static metadata: per-row group id, lane-major [1, n_pad]
    # (-1 marks padded rows).
    gid_np = np.full((1, n_pad), -1, dtype=np.int32)
    gid_np[0, :n_rows] = np.repeat(
        np.arange(n_groups, dtype=np.int32),
        np.asarray(group_list, dtype=np.int64))
    gid_p = jnp.asarray(gid_np)

    # bf16 MXU operands; zero-pad x rows (excluded via gid=-1), pad the
    # classifier lane dim to 128 for dense output stores.
    x_bf = x.astype(jnp.bfloat16)
    if n_pad > n_rows:
        x_bf = jnp.concatenate(
            [x_bf, jnp.zeros((n_pad - n_rows, in_feats), jnp.bfloat16)], axis=0)
    wc_p = jnp.zeros((_H2, c_pad), jnp.bfloat16
                     ).at[:, :n_classes].set(wc.astype(jnp.bfloat16))

    # VMEM budget estimate -> vmem_limit (<= 48 MiB so it fits v7x with headroom).
    weight_bytes = 2 * 2 * (in_feats * _H1 + _H1 * _H2 + _H2 * c_pad)
    est = (2 * tm * bytes_per_row + weight_bytes
           + 2 * 2 * (_H1 + _H2) * 4
           + 8 * _LANES * 4
           + 2 * g_pad * c_pad * 4)
    vmem_limit = int(min(48 * 2**20, max(32 * 2**20, 2 * est)))

    flops = (2 * n_pad * (in_feats * _H1 + _H1 * _H2 + _H2 * g_pad)
             + 2 * 2 * g_pad * _H2 * c_pad)
    bytes_accessed = (n_pad * (in_feats * 2 + 4)
                      + (in_feats * _H1 + _H1 * _H2 + _H2 * c_pad) * 2
                      + (_H1 + _H2) * 4
                      + 2 * g_pad * c_pad * 4)

    partials = pl.pallas_call(
        _net_kernel,
        out_shape=jax.ShapeDtypeStruct((2, g_pad, c_pad), jnp.float32),
        grid_spec=pltpu.PrefetchScalarGridSpec(
            num_scalar_prefetch=0,
            grid=(2, n_half),
            in_specs=[
                pl.BlockSpec((tm, in_feats), lambda c, t: (c * n_half + t, 0)),  # x tile
                pl.BlockSpec((1, tm), lambda c, t: (0, c * n_half + t)),         # gid tile
                pl.BlockSpec((in_feats, _H1), lambda c, t: (0, 0)),              # W1 (resident)
                pl.BlockSpec((1, _H1), lambda c, t: (0, 0)),                     # b1
                pl.BlockSpec((_H1, _H2), lambda c, t: (0, 0)),                   # W2
                pl.BlockSpec((1, _H2), lambda c, t: (0, 0)),                     # b2
                pl.BlockSpec((_H2, c_pad), lambda c, t: (0, 0)),                 # Wc (lane-padded)
            ],
            out_specs=pl.BlockSpec((1, g_pad, c_pad), lambda c, t: (c, 0, 0)),
            scratch_shapes=[pltpu.VMEM((g_pad, _H2), jnp.float32)],
        ),
        compiler_params=pltpu.CompilerParams(
            dimension_semantics=("parallel", "arbitrary"),
            vmem_limit_bytes=vmem_limit),
        cost_estimate=pl.CostEstimate(flops=flops, transcendentals=0,
                                      bytes_accessed=bytes_accessed),
    )(x_bf, gid_p,
      w1.astype(jnp.bfloat16), b1.astype(jnp.float32).reshape(1, _H1),
      w2.astype(jnp.bfloat16), b2.astype(jnp.float32).reshape(1, _H2),
      wc_p)

    # Tiny f32 epilogue: combine the two per-core partials, apply the group
    # mean (1/size) and the classifier bias, slice away the lane padding.
    inv_sz = jnp.asarray(
        1.0 / np.asarray(group_list, dtype=np.float32)).reshape(n_groups, 1)
    agg = partials.sum(axis=0)[:n_groups, :n_classes]
    return agg * inv_sz + bc.reshape(1, n_classes).astype(jnp.float32)


def init_params(key, in_feats, n_classes):
    """Deterministic synthetic parameters matching the PyTorch module shapes.

    Weights stored [in, out] (transpose of nn.Linear.weight), biases [1, out].
    """
    k1, k2, k3, k4, k5, k6 = jax.random.split(key, 6)
    w1 = jax.random.normal(k1, (in_feats, _H1), jnp.float32) * 0.1
    b1 = jax.random.normal(k2, (1, _H1), jnp.float32) * 0.01
    w2 = jax.random.normal(k3, (_H1, _H2), jnp.float32) * 0.1
    b2 = jax.random.normal(k4, (1, _H2), jnp.float32) * 0.01
    wc = jax.random.normal(k5, (_H2, n_classes), jnp.float32) * 0.1
    bc = jax.random.normal(k6, (1, n_classes), jnp.float32) * 0.01
    return (w1, b1, w2, b2, wc, bc)


def net_forward_ref(x, params, group_list):
    """Pure-JAX f32 reference for correctness checking."""
    w1, b1, w2, b2, wc, bc = params
    h1 = jnp.maximum(x @ w1 + b1, 0.0)
    h2 = jnp.maximum(h1 @ w2 + b2, 0.0)
    outs = []
    start = 0
    for size in group_list:
        outs.append(jnp.mean(h2[start:start + size], axis=0))
        start += size
    newh = jnp.stack(outs, axis=0)
    return newh @ wc + bc


if __name__ == "__main__":
    key = jax.random.PRNGKey(0)
    kx, kp = jax.random.split(key)

    in_feats = 16
    n_classes = 4
    # 300 rows, 4 groups; boundaries straddle row tiles AND the 2-core split.
    group_list = [40, 70, 90, 100]
    n_rows = sum(group_list)

    x = jax.random.normal(kx, (n_rows, in_feats), jnp.float32)
    params = init_params(kp, in_feats, n_classes)

    # tm=128 -> 2 row tiles per core here: exercises cross-tile accumulation
    # and the cross-core partial-sum combine (default tm=2048 for real sizes).
    out = net_forward(x, params, group_list, aggregate_mode="average", tm=128)
    out = jax.block_until_ready(out)

    ref = net_forward_ref(x, params, group_list)
    assert out.shape == (len(group_list), n_classes)
    max_err = float(jnp.max(jnp.abs(out - ref)))
    assert jnp.allclose(out, ref, atol=2e-2, rtol=2e-2), (
        f"mismatch vs reference: max|diff|={max_err}")

    print("KERNEL_OK")
</pallas_src>

<mosaic_0001>
module attributes {stable_mosaic.version = 11 : i64} {
  func.func @_net_kernel(%arg0: i32, %arg1: i32, %arg2: memref<128x16xbf16, #tpu.memory_space<vmem>>, %arg3: memref<1x128xi32, #tpu.memory_space<vmem>>, %arg4: memref<16x64xbf16, #tpu.memory_space<vmem>>, %arg5: memref<1x64xf32, #tpu.memory_space<vmem>>, %arg6: memref<64x32xbf16, #tpu.memory_space<vmem>>, %arg7: memref<1x32xf32, #tpu.memory_space<vmem>>, %arg8: memref<32x128xbf16, #tpu.memory_space<vmem>>, %arg9: memref<1x8x128xf32, #tpu.memory_space<vmem>>, %arg10: memref<8x32xf32, #tpu.memory_space<vmem>>) attributes {dimension_semantics = [#tpu.dimension_semantics<parallel>, #tpu.dimension_semantics<arbitrary>], iteration_bounds = array<i64: 2, 2>, scalar_prefetch = 0 : i64, scratch_operands = 1 : i64, tpu.core_type = #tpu.core_type<tc>, window_params = [{transform_indices = @transform_0, window_bounds = array<i64: 128, 16>}, {transform_indices = @transform_1, window_bounds = array<i64: 1, 128>}, {pipeline_mode = #tpu.pipeline_mode<synchronous>, transform_indices = @transform_2, window_bounds = array<i64: 16, 64>}, {pipeline_mode = #tpu.pipeline_mode<synchronous>, transform_indices = @transform_3, window_bounds = array<i64: 1, 64>}, {pipeline_mode = #tpu.pipeline_mode<synchronous>, transform_indices = @transform_4, window_bounds = array<i64: 64, 32>}, {pipeline_mode = #tpu.pipeline_mode<synchronous>, transform_indices = @transform_5, window_bounds = array<i64: 1, 32>}, {pipeline_mode = #tpu.pipeline_mode<synchronous>, transform_indices = @transform_6, window_bounds = array<i64: 32, 128>}, {transform_indices = @transform_7, window_bounds = array<i64: 1, 8, 128>}]} {
    %c0_i32 = arith.constant 0 : i32
    %0 = arith.cmpi eq, %arg1, %c0_i32 : i32
    %1 = arith.extui %0 : i1 to i32
    %c0_i32_0 = arith.constant 0 : i32
    %2 = arith.cmpi ne, %1, %c0_i32_0 : i32
    scf.if %2 {
      %cst_21 = arith.constant 0.000000e+00 : f32
      %34 = vector.broadcast %cst_21 : f32 to vector<8x32xf32>
      %c0_22 = arith.constant 0 : index
      %c0_23 = arith.constant 0 : index
      %35 = vector.load %arg10[%c0_22, %c0_23] : memref<8x32xf32, #tpu.memory_space<vmem>>, vector<8x32xf32>
      tpu.vector_store %arg10[%c0_22, %c0_23], %34 {strides = array<i32>} : memref<8x32xf32, #tpu.memory_space<vmem>>, vector<8x32xf32>,
    } else {
    }
    %c0 = arith.constant 0 : index
    %c0_1 = arith.constant 0 : index
    %3 = vector.load %arg2[%c0, %c0_1] : memref<128x16xbf16, #tpu.memory_space<vmem>>, vector<128x16xbf16>
    %c0_2 = arith.constant 0 : index
    %c0_3 = arith.constant 0 : index
    %4 = vector.load %arg4[%c0_2, %c0_3] : memref<16x64xbf16, #tpu.memory_space<vmem>>, vector<16x64xbf16>
    %cst = arith.constant dense<0.000000e+00> : vector<128x64xf32>
    %5 = tpu.matmul %3, %4, %cst {dimension_numbers = #tpu.dot_dimension_numbers<[1], [0], [0], [1], [0, 0, 1, 1], [], []>} : vector<128x16xbf16>, vector<16x64xbf16>, vector<128x64xf32> -> vector<128x64xf32>
    %c0_4 = arith.constant 0 : index
    %c0_5 = arith.constant 0 : index
    %6 = vector.load %arg5[%c0_4, %c0_5] : memref<1x64xf32, #tpu.memory_space<vmem>>, vector<1x64xf32>
    %7 = vector.broadcast %6 : vector<1x64xf32> to vector<128x64xf32>
    %8 = arith.addf %5, %7 : vector<128x64xf32>
    %cst_6 = arith.constant 0.000000e+00 : f32
    %9 = vector.broadcast %cst_6 : f32 to vector<128x64xf32>
    %10 = arith.maximumf %8, %9 : vector<128x64xf32>
    %11 = arith.truncf %10 : vector<128x64xf32> to vector<128x64xbf16>
    %c0_7 = arith.constant 0 : index
    %c0_8 = arith.constant 0 : index
    %12 = vector.load %arg6[%c0_7, %c0_8] : memref<64x32xbf16, #tpu.memory_space<vmem>>, vector<64x32xbf16>
    %cst_9 = arith.constant dense<0.000000e+00> : vector<128x32xf32>
    %13 = tpu.matmul %11, %12, %cst_9 {dimension_numbers = #tpu.dot_dimension_numbers<[1], [0], [0], [1], [0, 0, 1, 1], [], []>} : vector<128x64xbf16>, vector<64x32xbf16>, vector<128x32xf32> -> vector<128x32xf32>
    %c0_10 = arith.constant 0 : index
    %c0_11 = arith.constant 0 : index
    %14 = vector.load %arg7[%c0_10, %c0_11] : memref<1x32xf32, #tpu.memory_space<vmem>>, vector<1x32xf32>
    %15 = vector.broadcast %14 : vector<1x32xf32> to vector<128x32xf32>
    %16 = arith.addf %13, %15 : vector<128x32xf32>
    %cst_12 = arith.constant 0.000000e+00 : f32
    %17 = vector.broadcast %cst_12 : f32 to vector<128x32xf32>
    %18 = arith.maximumf %16, %17 : vector<128x32xf32>
    %c0_13 = arith.constant 0 : index
    %c0_14 = arith.constant 0 : index
    %19 = vector.load %arg3[%c0_13, %c0_14] : memref<1x128xi32, #tpu.memory_space<vmem>>, vector<1x128xi32>
    %20 = tpu.iota {dimensions = array<i32: 0>} : vector<8x128xi32>
    %21 = vector.broadcast %19 : vector<1x128xi32> to vector<8x128xi32>
    %22 = arith.cmpi eq, %21, %20 : vector<8x128xi32>
    %23 = arith.extui %22 : vector<8x128xi1> to vector<8x128xi32>
    %24 = arith.sitofp %23 : vector<8x128xi32> to vector<8x128xf32>
    %25 = arith.truncf %24 : vector<8x128xf32> to vector<8x128xbf16>
    %c0_15 = arith.constant 0 : index
    %c0_16 = arith.constant 0 : index
    %26 = vector.load %arg10[%c0_15, %c0_16] : memref<8x32xf32, #tpu.memory_space<vmem>>, vector<8x32xf32>
    %27 = arith.truncf %18 : vector<128x32xf32> to vector<128x32xbf16>
    %cst_17 = arith.constant dense<0.000000e+00> : vector<8x32xf32>
    %28 = tpu.matmul %25, %27, %cst_17 {dimension_numbers = #tpu.dot_dimension_numbers<[1], [0], [0], [1], [0, 0, 1, 1], [], []>} : vector<8x128xbf16>, vector<128x32xbf16>, vector<8x32xf32> -> vector<8x32xf32>
    %29 = arith.addf %26, %28 : vector<8x32xf32>
    %c0_18 = arith.constant 0 : index
    %c0_19 = arith.constant 0 : index
    %30 = vector.load %arg10[%c0_18, %c0_19] : memref<8x32xf32, #tpu.memory_space<vmem>>, vector<8x32xf32>
    tpu.vector_store %arg10[%c0_18, %c0_19], %29 {strides = array<i32>} : memref<8x32xf32, #tpu.memory_space<vmem>>, vector<8x32xf32>,
    %c1_i32 = arith.constant 1 : i32
    %31 = arith.cmpi eq, %arg1, %c1_i32 : i32
    %32 = arith.extui %31 : i1 to i32
    %c0_i32_20 = arith.constant 0 : i32
    %33 = arith.cmpi ne, %32, %c0_i32_20 : i32
    scf.if %33 {
      %c0_21 = arith.constant 0 : index
      %c0_22 = arith.constant 0 : index
      %34 = vector.load %arg10[%c0_21, %c0_22] : memref<8x32xf32, #tpu.memory_space<vmem>>, vector<8x32xf32>
      %35 = arith.truncf %34 : vector<8x32xf32> to vector<8x32xbf16>
      %c0_23 = arith.constant 0 : index
      %c0_24 = arith.constant 0 : index
      %36 = vector.load %arg8[%c0_23, %c0_24] : memref<32x128xbf16, #tpu.memory_space<vmem>>, vector<32x128xbf16>
      %cst_25 = arith.constant dense<0.000000e+00> : vector<8x128xf32>
      %37 = tpu.matmul %35, %36, %cst_25 {dimension_numbers = #tpu.dot_dimension_numbers<[1], [0], [0], [1], [0, 0, 1, 1], [], []>} : vector<8x32xbf16>, vector<32x128xbf16>, vector<8x128xf32> -> vector<8x128xf32>
      %c0_26 = arith.constant 0 : index
      %c0_27 = arith.constant 0 : index
      %c0_28 = arith.constant 0 : index
      %38 = vector.load %arg9[%c0_26, %c0_27, %c0_28] : memref<1x8x128xf32, #tpu.memory_space<vmem>>, vector<1x8x128xf32>
      %39 = vector.shape_cast %38 : vector<1x8x128xf32> to vector<8x128xf32>
      %40 = vector.shape_cast %37 : vector<8x128xf32> to vector<1x8x128xf32>
      tpu.vector_store %arg9[%c0_26, %c0_27, %c0_28], %40 {strides = array<i32>} : memref<1x8x128xf32, #tpu.memory_space<vmem>>, vector<1x8x128xf32>,
    } else {
    }
    return
  }
  func.func @transform_0(%arg0: i32, %arg1: i32) -> (i32, i32) {
    %c2_i32 = arith.constant 2 : i32
    %0 = arith.muli %arg0, %c2_i32 : i32
    %1 = arith.addi %0, %arg1 : i32
    %c0_i32 = arith.constant 0 : i32
    %c0_i32_0 = arith.constant 0 : i32
    return %1, %c0_i32 : i32, i32
  }
  func.func @transform_1(%arg0: i32, %arg1: i32) -> (i32, i32) {
    %c2_i32 = arith.constant 2 : i32
    %0 = arith.muli %arg0, %c2_i32 : i32
    %1 = arith.addi %0, %arg1 : i32
    %c0_i32 = arith.constant 0 : i32
    %c0_i32_0 = arith.constant 0 : i32
    return %c0_i32, %1 : i32, i32
  }
  func.func @transform_2(%arg0: i32, %arg1: i32) -> (i32, i32) {
    %c0_i32 = arith.constant 0 : i32
    %c0_i32_0 = arith.constant 0 : i32
    %c0_i32_1 = arith.constant 0 : i32
    return %c0_i32, %c0_i32_0 : i32, i32
  }
  func.func @transform_3(%arg0: i32, %arg1: i32) -> (i32, i32) {
    %c0_i32 = arith.constant 0 : i32
    %c0_i32_0 = arith.constant 0 : i32
    %c0_i32_1 = arith.constant 0 : i32
    return %c0_i32, %c0_i32_0 : i32, i32
  }
  func.func @transform_4(%arg0: i32, %arg1: i32) -> (i32, i32) {
    %c0_i32 = arith.constant 0 : i32
    %c0_i32_0 = arith.constant 0 : i32
    %c0_i32_1 = arith.constant 0 : i32
    return %c0_i32, %c0_i32_0 : i32, i32
  }
  func.func @transform_5(%arg0: i32, %arg1: i32) -> (i32, i32) {
    %c0_i32 = arith.constant 0 : i32
    %c0_i32_0 = arith.constant 0 : i32
    %c0_i32_1 = arith.constant 0 : i32
    return %c0_i32, %c0_i32_0 : i32, i32
  }
  func.func @transform_6(%arg0: i32, %arg1: i32) -> (i32, i32) {
    %c0_i32 = arith.constant 0 : i32
    %c0_i32_0 = arith.constant 0 : i32
    %c0_i32_1 = arith.constant 0 : i32
    return %c0_i32, %c0_i32_0 : i32, i32
  }
  func.func @transform_7(%arg0: i32, %arg1: i32) -> (i32, i32, i32) {
    %c0_i32 = arith.constant 0 : i32
    %c0_i32_0 = arith.constant 0 : i32
    %c0_i32_1 = arith.constant 0 : i32
    return %arg0, %c0_i32, %c0_i32_0 : i32, i32, i32
  }
}

</mosaic_0001>

<llo_original>
// kernel: tpu_custom_call.1
$region0: #{tpu_custom_call.1}
  #allocation0 [shape = 'u32[]', space=smem, size = 0x4, offset = 0x4, fixed_abs, tag = 'smem constant byte address 0x4 - core index']
  #allocation1 [shape = 'u32[72,128]{1,0:T(1,128)}', space=vmem, size = 0x9000, scoped, tag = 'internal scratch']
  #allocation2 [shape = 'f32[8,32]{1,0:T(8,128)}', space=vmem, size = 0x1000, scoped, tag = 'scratch operand']
  %s0 = inlined_call_operand.vmem [shape: bf16[512,16], index: 0, kind: input, shape index: {}]
  %s1 = inlined_call_operand.vmem [shape: s32[1,512], index: 1, kind: input, shape index: {}]
  %s2 = inlined_call_operand.vmem [shape: bf16[16,64], index: 2, kind: input, shape index: {}]
  %s3 = inlined_call_operand.vmem [shape: f32[1,64], index: 3, kind: input, shape index: {}]
  %s4 = inlined_call_operand.vmem [shape: bf16[64,32], index: 4, kind: input, shape index: {}]
  %s5 = inlined_call_operand.vmem [shape: f32[1,32], index: 5, kind: input, shape index: {}]
  %s6 = inlined_call_operand.vmem [shape: bf16[32,128], index: 6, kind: input, shape index: {}]
  %s7 = inlined_call_operand.hbm [shape: f32[2,8,128], index: 7, kind: output, shape index: {}]
  %s8 = sld [smem:[#allocation0]]
  $region69: #{tpu_custom_call.1} parent=0
    _
  %s10 = ssub.s32 1, %s8
  %s11 = scalar_select 0, %s10, %s8
  $region1: #{tpu_custom_call.1} parent=0
    #allocation3 [shape = 'u8[8192]{0}', space=vmem, size = 0x2000, scoped, tag = 'output window, operand 0']
    #allocation4 [shape = 's32[2]{0}', space=sflag, size = 0x8, scoped, tag = 'scoped memory for tpu_custom_call.1']
    %12 = vsyncpa [#allocation4], 0
    %s13 = scalar_lea.sflag [#allocation4], 1
    %14 = vsyncpa %s13, 0
    loop: start=0, step=1, limit=6
    $region2: #{tpu_custom_call.1} parent=1 // loop_pre_header
      _
    $region3: #{tpu_custom_call.1} parent=1 // loop_header
      %s16 = sphi 0, %s20
      %p17 = scmp.ge.s32.totalorder %s16, 6
      %s23 = sphi 0, %s35
      %s24 = sphi 0, %s31
      %s25 = sphi 0, %s23
      %s26 = sphi 0, %s24
      %s27 = sphi 0, %s25
      %s28 = sphi 0, %s26
      %s42 = sphi 0, %s44
      %s45 = sphi 0, %s42
      %s46 = sphi 0, %s45
      %s62 = sphi 0, %s46
      %s72 = sphi 0, %s74
      %s75 = sphi 0, %s72
      %s76 = sphi 0, %s75
      %s92 = sphi 0, %s76
      %s96 = sphi 0, %s96
      %s98 = sphi 0, %s96
      %s99 = sphi 0, %s98
      %s113 = sphi 0, %s99
      %s117 = sphi 0, %s117
      %s119 = sphi 0, %s117
      %s120 = sphi 0, %s119
      %s134 = sphi 0, %s120
      %s138 = sphi 0, %s138
      %s140 = sphi 0, %s138
      %s141 = sphi 0, %s140
      %s155 = sphi 0, %s141
      %s159 = sphi 0, %s159
      %s161 = sphi 0, %s159
      %s162 = sphi 0, %s161
      %s176 = sphi 0, %s162
      %s180 = sphi 0, %s180
      %s182 = sphi 0, %s180
      %s183 = sphi 0, %s182
      %s197 = sphi 0, %s183
      %s203 = sphi 0, %s205
      %s206 = sphi 0, %s203
      %s207 = sphi 0, %s206
      %s223 = sphi 0, %s207
    $region4: #{tpu_custom_call.1} parent=1 // loop_header_branch
      %19 = sbr.rel (%p17) target = $region8
    $region5: #{tpu_custom_call.1} parent=1 // loop_body
      %s21 = ssub.s32 %s16, 1
      %s22 = ssub.s32 %s16, 2
      %s29 = sadd.s32 1, %s24
      %p30 = scmp.ge.s32.totalorder %s29, 2
      %s31 = scalar_select %p30, 0, %s29
      %s32 = sadd.s32 1, %s23
      %s33 = scalar_select %p30, %s32, %s23
      %p34 = scmp.ge.s32.totalorder %s33, 2
      %s35 = scalar_select %p34, 0, %s33
      %s36 = smul.u32 %s23, 2
      %s37 = sadd.s32 %s36, %s24
      %s38 = smul.u32 %s35, 2
      %s39 = sadd.s32 %s38, %s31
      %s40 = ssub.s32 %s37, %s39
      %p41 = scmp.eq.s32.totalorder %s40, 0
      %s43 = sadd.s32 %s42, 1
      %s44 = scalar_select %p41, %s42, %s43
      %p47 = pneg %p41
      %p48 = scmp.eq.s32.totalorder %s16, 3
      %p49 = por %p47, %p48
      %p50 = scmp.ne.s32.totalorder %s42, %s45
      %p51 = scmp.eq.s32.totalorder %s16, 0
      %p52 = por %p50, %p51
      %p53 = scmp.ne.s32.totalorder %s42, %s45
      %p54 = scmp.eq.s32.totalorder %s21, 3
      %p55 = por %p53, %p54
      %p56 = scmp.ne.s32.totalorder %s45, %s46
      %p57 = scmp.eq.s32.totalorder %s21, 0
      %p58 = por %p56, %p57
      %p59 = scmp.ne.s32.totalorder %s45, %s46
      %p60 = scmp.eq.s32.totalorder %s22, 3
      %p61 = por %p59, %p60
      %p63 = scmp.ne.s32.totalorder %s46, %s62
      %p64 = scmp.eq.s32.totalorder %s22, 0
      %p65 = por %p63, %p64
      %s66 = smul.u32 %s23, 2
      %s67 = sadd.s32 %s66, %s24
      %s68 = smul.u32 %s35, 2
      %s69 = sadd.s32 %s68, %s31
      %s70 = ssub.s32 %s67, %s69
      %p71 = scmp.eq.s32.totalorder %s70, 0
      %s73 = sadd.s32 %s72, 1
      %s74 = scalar_select %p71, %s72, %s73
      %p77 = pneg %p71
      %p78 = scmp.eq.s32.totalorder %s16, 3
      %p79 = por %p77, %p78
      %p80 = scmp.ne.s32.totalorder %s72, %s75
      %p81 = scmp.eq.s32.totalorder %s16, 0
      %p82 = por %p80, %p81
      %p83 = scmp.ne.s32.totalorder %s72, %s75
      %p84 = scmp.eq.s32.totalorder %s21, 3
      %p85 = por %p83, %p84
      %p86 = scmp.ne.s32.totalorder %s75, %s76
      %p87 = scmp.eq.s32.totalorder %s21, 0
      %p88 = por %p86, %p87
      %p89 = scmp.ne.s32.totalorder %s75, %s76
      %p90 = scmp.eq.s32.totalorder %s22, 3
      %p91 = por %p89, %p90
      %p93 = scmp.ne.s32.totalorder %s76, %s92
      %p94 = scmp.eq.s32.totalorder %s22, 0
      %p95 = por %p93, %p94
      %s97 = sadd.s32 %s96, 1
      %p100 = scmp.eq.s32.totalorder %s16, 3
      %p101 = scmp.ne.s32.totalorder %s96, %s98
      %p102 = scmp.eq.s32.totalorder %s16, 0
      %p103 = por %p101, %p102
      %p104 = scmp.ne.s32.totalorder %s96, %s98
      %p105 = scmp.eq.s32.totalorder %s21, 3
      %p106 = por %p104, %p105
      %p107 = scmp.ne.s32.totalorder %s98, %s99
      %p108 = scmp.eq.s32.totalorder %s21, 0
      %p109 = por %p107, %p108
      %p110 = scmp.ne.s32.totalorder %s98, %s99
      %p111 = scmp.eq.s32.totalorder %s22, 3
      %p112 = por %p110, %p111
      %p114 = scmp.ne.s32.totalorder %s99, %s113
      %p115 = scmp.eq.s32.totalorder %s22, 0
      %p116 = por %p114, %p115
      %s118 = sadd.s32 %s117, 1
      %p121 = scmp.eq.s32.totalorder %s16, 3
      %p122 = scmp.ne.s32.totalorder %s117, %s119
      %p123 = scmp.eq.s32.totalorder %s16, 0
      %p124 = por %p122, %p123
      %p125 = scmp.ne.s32.totalorder %s117, %s119
      %p126 = scmp.eq.s32.totalorder %s21, 3
      %p127 = por %p125, %p126
      %p128 = scmp.ne.s32.totalorder %s119, %s120
      %p129 = scmp.eq.s32.totalorder %s21, 0
      %p130 = por %p128, %p129
      %p131 = scmp.ne.s32.totalorder %s119, %s120
      %p132 = scmp.eq.s32.totalorder %s22, 3
      %p133 = por %p131, %p132
      %p135 = scmp.ne.s32.totalorder %s120, %s134
      %p136 = scmp.eq.s32.totalorder %s22, 0
      %p137 = por %p135, %p136
      %s139 = sadd.s32 %s138, 1
      %p142 = scmp.eq.s32.totalorder %s16, 3
      %p143 = scmp.ne.s32.totalorder %s138, %s140
      %p144 = scmp.eq.s32.totalorder %s16, 0
      %p145 = por %p143, %p144
      %p146 = scmp.ne.s32.totalorder %s138, %s140
      %p147 = scmp.eq.s32.totalorder %s21, 3
      %p148 = por %p146, %p147
      %p149 = scmp.ne.s32.totalorder %s140, %s141
      %p150 = scmp.eq.s32.totalorder %s21, 0
      %p151 = por %p149, %p150
      %p152 = scmp.ne.s32.totalorder %s140, %s141
      %p153 = scmp.eq.s32.totalorder %s22, 3
      %p154 = por %p152, %p153
      %p156 = scmp.ne.s32.totalorder %s141, %s155
      %p157 = scmp.eq.s32.totalorder %s22, 0
      %p158 = por %p156, %p157
      %s160 = sadd.s32 %s159, 1
      %p163 = scmp.eq.s32.totalorder %s16, 3
      %p164 = scmp.ne.s32.totalorder %s159, %s161
      %p165 = scmp.eq.s32.totalorder %s16, 0
      %p166 = por %p164, %p165
      %p167 = scmp.ne.s32.totalorder %s159, %s161
      %p168 = scmp.eq.s32.totalorder %s21, 3
      %p169 = por %p167, %p168
      %p170 = scmp.ne.s32.totalorder %s161, %s162
      %p171 = scmp.eq.s32.totalorder %s21, 0
      %p172 = por %p170, %p171
      %p173 = scmp.ne.s32.totalorder %s161, %s162
      %p174 = scmp.eq.s32.totalorder %s22, 3
      %p175 = por %p173, %p174
      %p177 = scmp.ne.s32.totalorder %s162, %s176
      %p178 = scmp.eq.s32.totalorder %s22, 0
      %p179 = por %p177, %p178
      %s181 = sadd.s32 %s180, 1
      %p184 = scmp.eq.s32.totalorder %s16, 3
      %p185 = scmp.ne.s32.totalorder %s180, %s182
      %p186 = scmp.eq.s32.totalorder %s16, 0
      %p187 = por %p185, %p186
      %p188 = scmp.ne.s32.totalorder %s180, %s182
      %p189 = scmp.eq.s32.totalorder %s21, 3
      %p190 = por %p188, %p189
      %p191 = scmp.ne.s32.totalorder %s182, %s183
      %p192 = scmp.eq.s32.totalorder %s21, 0
      %p193 = por %p191, %p192
      %p194 = scmp.ne.s32.totalorder %s182, %s183
      %p195 = scmp.eq.s32.totalorder %s22, 3
      %p196 = por %p194, %p195
      %p198 = scmp.ne.s32.totalorder %s183, %s197
      %p199 = scmp.eq.s32.totalorder %s22, 0
      %p200 = por %p198, %p199
      %s201 = ssub.s32 %s23, %s35
      %p202 = scmp.eq.s32.totalorder %s201, 0
      %s204 = sadd.s32 %s203, 1
      %s205 = scalar_select %p202, %s203, %s204
      %p208 = pneg %p202
      %p209 = scmp.eq.s32.totalorder %s16, 3
      %p210 = por %p208, %p209
      %p211 = scmp.ne.s32.totalorder %s203, %s206
      %p212 = scmp.eq.s32.totalorder %s16, 0
      %p213 = por %p211, %p212
      %p214 = scmp.ne.s32.totalorder %s203, %s206
      %p215 = scmp.eq.s32.totalorder %s21, 3
      %p216 = por %p214, %p215
      %p217 = scmp.ne.s32.totalorder %s206, %s207
      %p218 = scmp.eq.s32.totalorder %s21, 0
      %p219 = por %p217, %p218
      %p220 = scmp.ne.s32.totalorder %s206, %s207
      %p221 = scmp.eq.s32.totalorder %s22, 3
      %p222 = por %p220, %p221
      %p224 = scmp.ne.s32.totalorder %s207, %s223
      %p225 = scmp.eq.s32.totalorder %s22, 0
      %p226 = por %p224, %p225
      %p227 = scmp.le.s32.totalorder 1, %s16
      %p228 = scmp.lt.s32.totalorder %s16, 5
      %p229 = pnand %p227, %p228
      %p230 = pneg %p229
      // Predicated region
      $region9: #{tpu_custom_call.1} parent=5 // pred_check
        _
      $region10: #{tpu_custom_call.1} parent=5 // pred_check_branch
        %232 = sbr.rel (%p229) target = $region12
      $region11: #{tpu_custom_call.1} parent=5 // pred_region
        %s233 = ssub.s32 %s16, 1
        // Predicated region
        $region13: #{tpu_custom_call.1} parent=11 // pred_check
          %p234 = pneg %p109
        $region14: #{tpu_custom_call.1} parent=11 // pred_check_branch
          %236 = sbr.rel (%p234) target = $region16
        $region15: #{tpu_custom_call.1} parent=11 // pred_region
          _
        $region16: #{tpu_custom_call.1} parent=11 // pred_fallthru
          _
        // Predicated region
        $region17: #{tpu_custom_call.1} parent=11 // pred_check
          %p237 = pneg %p130
        $region18: #{tpu_custom_call.1} parent=11 // pred_check_branch
          %239 = sbr.rel (%p237) target = $region20
        $region19: #{tpu_custom_call.1} parent=11 // pred_region
          _
        $region20: #{tpu_custom_call.1} parent=11 // pred_fallthru
          _
        // Predicated region
        $region21: #{tpu_custom_call.1} parent=11 // pred_check
          %p240 = pneg %p151
        $region22: #{tpu_custom_call.1} parent=11 // pred_check_branch
          %242 = sbr.rel (%p240) target = $region24
        $region23: #{tpu_custom_call.1} parent=11 // pred_region
          _
        $region24: #{tpu_custom_call.1} parent=11 // pred_fallthru
          _
        // Predicated region
        $region25: #{tpu_custom_call.1} parent=11 // pred_check
          %p243 = pneg %p172
        $region26: #{tpu_custom_call.1} parent=11 // pred_check_branch
          %245 = sbr.rel (%p243) target = $region28
        $region27: #{tpu_custom_call.1} parent=11 // pred_region
          _
        $region28: #{tpu_custom_call.1} parent=11 // pred_fallthru
          _
        // Predicated region
        $region29: #{tpu_custom_call.1} parent=11 // pred_check
          %p246 = pneg %p193
        $region30: #{tpu_custom_call.1} parent=11 // pred_check_branch
          %248 = sbr.rel (%p246) target = $region32
        $region31: #{tpu_custom_call.1} parent=11 // pred_region
          _
        $region32: #{tpu_custom_call.1} parent=11 // pred_fallthru
          _
      $region12: #{tpu_custom_call.1} parent=5 // pred_fallthru
        _
      %p249 = scmp.lt.s32.totalorder %s16, 4
      // Predicated region
      $region33: #{tpu_custom_call.1} parent=5 // pred_check
        %p250 = pneg %p249
      $region34: #{tpu_custom_call.1} parent=5 // pred_check_branch
        %252 = sbr.rel (%p250) target = $region36
      $region35: #{tpu_custom_call.1} parent=5 // pred_region
        // Predicated region
        $region37: #{tpu_custom_call.1} parent=35 // pred_check
          %p253 = pneg %p52
        $region38: #{tpu_custom_call.1} parent=35 // pred_check_branch
          %255 = sbr.rel (%p253) target = $region40
        $region39: #{tpu_custom_call.1} parent=35 // pred_region
          %s256 = smul.u32 %s23, 2
          %s257 = sadd.s32 %s256, %s24
          %s258 = smul.u32 16, %s257
          %p259 = scmp.lt.s32.totalorder %s258, 63
          %s260 = scalar_select %p259, %s258, 63
          %s261 = smul.addr %s260, 4
          %s262 = scalar_lea.vmem %s0, %s261
          %s263 = smul.u32 %s23, 2
          %s264 = sadd.s32 %s263, %s24
          %s265 = smul.u32 16, %s264
        $region40: #{tpu_custom_call.1} parent=35 // pred_fallthru
          _
        // Predicated region
        $region41: #{tpu_custom_call.1} parent=35 // pred_check
          %p266 = pneg %p82
        $region42: #{tpu_custom_call.1} parent=35 // pred_check_branch
          %268 = sbr.rel (%p266) target = $region44
        $region43: #{tpu_custom_call.1} parent=35 // pred_region
          %s269 = smul.u32 %s23, 2
          %s270 = sadd.s32 %s269, %s24
          %p271 = scmp.lt.s32.totalorder %s270, 3
          %s272 = scalar_select %p271, %s270, 3
          %s273 = scalar_lea.vmem %s1, %s272
          %s274 = smul.u32 %s23, 2
          %s275 = sadd.s32 %s274, %s24
        $region44: #{tpu_custom_call.1} parent=35 // pred_fallthru
          _
      $region36: #{tpu_custom_call.1} parent=5 // pred_fallthru
        _
      %p276 = scmp.le.s32.totalorder 1, %s16
      %p277 = scmp.lt.s32.totalorder %s16, 5
      %p278 = pnand %p276, %p277
      %p279 = pneg %p278
      // Predicated region
      $region45: #{tpu_custom_call.1} parent=5 // pred_check
        _
      $region46: #{tpu_custom_call.1} parent=5 // pred_check_branch
        %281 = sbr.rel (%p278) target = $region48
      $region47: #{tpu_custom_call.1} parent=5 // pred_region
        %s282 = ssub.s32 %s16, 1
        %s283 = smul.u32 %s25, 2
        %s284 = sadd.s32 %s283, %s26
        %s285 = smul.u32 16, %s284
        %p286 = scmp.lt.s32.totalorder %s285, 63
        %s287 = scalar_select %p286, %s285, 63
        %s288 = smul.addr %s287, 4
        %s289 = scalar_lea.vmem %s0, %s288
        %p290 = pneg %p58
        %p291 = pneg %p55
        %s292 = smul.u32 %s25, 2
        %s293 = sadd.s32 %s292, %s26
        %p294 = scmp.lt.s32.totalorder %s293, 3
        %s295 = scalar_select %p294, %s293, 3
        %s296 = scalar_lea.vmem %s1, %s295
        %p297 = pneg %p88
        %p298 = pneg %p85
        %p299 = pneg %p109
        %p300 = pneg %p106
        %p301 = pneg %p130
        %p302 = pneg %p127
        %p303 = pneg %p151
        %p304 = pneg %p148
        %p305 = pneg %p172
        %p306 = pneg %p169
        %p307 = pneg %p193
        %p308 = pneg %p190
        %p309 = pneg %p219
        %p310 = pneg %p216
        %s311 = sand.u32 %s206, 1
        %s312 = scalar_lea.sflag [#allocation4], %s311
        %s313 = sand.u32 %s206, 1
        %s314 = smul.addr %s313, 8
        %s315 = scalar_lea.vmem [#allocation3], %s314
        %s316 = smul.u32 %s25, 2
        %s317 = sadd.s32 %s316, %s26
        %s318 = smul.u32 16, %s317
        %p319 = scmp.lt.s32.totalorder %s318, 63
        %s320 = scalar_select %p319, %s318, 63
        %s321 = smul.addr %s320, 4
        %s322 = scalar_lea.vmem %s0, %s321
        %s323 = smul.u32 %s25, 2
        %s324 = sadd.s32 %s323, %s26
        %s325 = smul.u32 16, %s324
        %s326 = smul.u32 %s25, 2
        %s327 = sadd.s32 %s326, %s26
        %p328 = scmp.lt.s32.totalorder %s327, 3
        %s329 = scalar_select %p328, %s327, 3
        %s330 = scalar_lea.vmem %s1, %s329
        %s331 = smul.u32 %s25, 2
        %s332 = sadd.s32 %s331, %s26
        %p334 = scmp.eq.s32.totalorder %s26, 0
        // Predicated region
        $region49: #{tpu_custom_call.1} parent=47 // pred_check
          %p335 = pneg %p334
        $region50: #{tpu_custom_call.1} parent=47 // pred_check_branch
          %337 = sbr.rel (%p335) target = $region52
        $region51: #{tpu_custom_call.1} parent=47 // pred_region
          %vm338 = vcmask 261120
          %339 = vst.msk [vmem:[#allocation2] sm:$0xff] %vm338, 0.0
        $region52: #{tpu_custom_call.1} parent=47 // pred_fallthru
          _
        %v340 = vld [vmem:[%s322] sm:$0xf]
        %v341 = vld [vmem:[%s322 + $0x4] sm:$0xf]
        %v342 = vld [vmem:[%s322 + $0x8] sm:$0xf]
        %v343 = vld [vmem:[%s322 + $0xc] sm:$0xf]
        %v344 = vld [vmem:[%s322 + $0x10] sm:$0xf]
        %v345 = vld [vmem:[%s322 + $0x14] sm:$0xf]
        %v346 = vld [vmem:[%s322 + $0x18] sm:$0xf]
        %v347 = vld [vmem:[%s322 + $0x1c] sm:$0xf]
        %v348 = vld [vmem:[%s322 + $0x20] sm:$0xf]
        %v349 = vld [vmem:[%s322 + $0x24] sm:$0xf]
        %v350 = vld [vmem:[%s322 + $0x28] sm:$0xf]
        %v351 = vld [vmem:[%s322 + $0x2c] sm:$0xf]
        %v352 = vld [vmem:[%s322 + $0x30] sm:$0xf]
        %v353 = vld [vmem:[%s322 + $0x34] sm:$0xf]
        %v354 = vld [vmem:[%s322 + $0x38] sm:$0xf]
        %v355 = vld [vmem:[%s322 + $0x3c] sm:$0xf]
        %v356 = vld [vmem:[%s2] sm:$0xf]
        %v357 = vld [vmem:[%s2 + $0x4] sm:$0xf]
        %v358 = vld [vmem:[%s3] sm:$0x1]
        %v360 = vperm.slane %v358, 0
        %v378 = vunpack.c.l.b16 %v340
        %v379 = vunpack.c.l.b16 %v341
        %v380 = vunpack.c.l.b16 %v342
        %v381 = vunpack.c.l.b16 %v343
        %v382 = vunpack.c.l.b16 %v344
        %v383 = vunpack.c.l.b16 %v345
        %v384 = vunpack.c.l.b16 %v346
        %v385 = vunpack.c.l.b16 %v347
        %v386 = vunpack.c.l.b16 %v348
        %v387 = vunpack.c.l.b16 %v349
        %v388 = vunpack.c.l.b16 %v350
        %v389 = vunpack.c.l.b16 %v351
        %v390 = vunpack.c.l.b16 %v352
        %v391 = vunpack.c.l.b16 %v353
        %v392 = vunpack.c.l.b16 %v354
        %v393 = vunpack.c.l.b16 %v355
        %v394 = vpack.c.b16 %v379, %v378
        %v395 = vpack.c.b16 %v381, %v380
        %v396 = vpack.c.b16 %v383, %v382
        %v397 = vpack.c.b16 %v385, %v384
        %v398 = vpack.c.b16 %v387, %v386
        %v399 = vpack.c.b16 %v389, %v388
        %v400 = vpack.c.b16 %v391, %v390
        %v401 = vpack.c.b16 %v393, %v392
        %v404 = vunpack.c.l.b16 %v356
        %v405 = vunpack.c.l.b16 %v357
        %v406 = vpack.c.b16 %v405, %v404
        %vm408 = vcmask 130048
        %v410 = vsel %vm408, %v394, 0
        %v413 = vsel %vm408, %v395, 0
        %v416 = vsel %vm408, %v396, 0
        %v419 = vsel %vm408, %v397, 0
        %v422 = vsel %vm408, %v398, 0
        %v425 = vsel %vm408, %v399, 0
        %v428 = vsel %vm408, %v400, 0
        %v431 = vsel %vm408, %v401, 0
        %433 = vmatpush.bf16.msra.mxu0 0
        %434 = vmatpush.bf16.msra.mxu0 0
        %435 = vmatpush.bf16.msra.mxu0 0
        %436 = vmatpush.bf16.msra.mxu0 0
        %437 = vmatpush.bf16.msra.mxu0 0
        %438 = vmatpush.bf16.msra.mxu0 0
        %439 = vmatpush.bf16.msra.mxu0 0
        %440 = vmatpush.bf16.msra.mxu0 %v406
        %441 = vmatmul.bf16.gmra.mxu0 %v410
        %v442 = vpop.f32.mrf.mxu0
        %v443 = vadd.f32 %v360, %v442
        %v444 = vpop.f32.mrf.mxu0
        %v445 = vadd.f32 %v360, %v444
        %446 = vmatmul.bf16.gmra.mxu0 %v413
        %v447 = vpop.f32.mrf.mxu0
        %v448 = vadd.f32 %v360, %v447
        %v449 = vpop.f32.mrf.mxu0
        %v450 = vadd.f32 %v360, %v449
        %451 = vmatmul.bf16.gmra.mxu0 %v416
        %v452 = vpop.f32.mrf.mxu0
        %v453 = vadd.f32 %v360, %v452
        %v454 = vpop.f32.mrf.mxu0
        %v455 = vadd.f32 %v360, %v454
        %456 = vmatmul.bf16.gmra.mxu0 %v419
        %v457 = vpop.f32.mrf.mxu0
        %v458 = vadd.f32 %v360, %v457
        %v459 = vpop.f32.mrf.mxu0
        %v460 = vadd.f32 %v360, %v459
        %461 = vmatmul.bf16.gmra.mxu0 %v422
        %v462 = vpop.f32.mrf.mxu0
        %v463 = vadd.f32 %v360, %v462
        %v464 = vpop.f32.mrf.mxu0
        %v465 = vadd.f32 %v360, %v464
        %466 = vmatmul.bf16.gmra.mxu0 %v425
        %v467 = vpop.f32.mrf.mxu0
        %v468 = vadd.f32 %v360, %v467
        %v469 = vpop.f32.mrf.mxu0
        %v470 = vadd.f32 %v360, %v469
        %471 = vmatmul.bf16.gmra.mxu0 %v428
        %v472 = vpop.f32.mrf.mxu0
        %v473 = vadd.f32 %v360, %v472
        %v474 = vpop.f32.mrf.mxu0
        %v475 = vadd.f32 %v360, %v474
        %476 = vmatmul.bf16.gmra.mxu0 %v431
        %v477 = vpop.f32.mrf.mxu0
        %v478 = vadd.f32 %v360, %v477
        %v479 = vpop.f32.mrf.mxu0
        %v480 = vadd.f32 %v360, %v479
        %481 = vdwg.mxu0
        %v482 = vmax.f32 %v443, 0.0
        %v483 = vmax.f32 %v445, 0.0
        %v484 = vmax.f32 %v448, 0.0
        %v485 = vmax.f32 %v450, 0.0
        %v486 = vmax.f32 %v453, 0.0
        %v487 = vmax.f32 %v455, 0.0
        %v488 = vmax.f32 %v458, 0.0
        %v489 = vmax.f32 %v460, 0.0
        %v490 = vmax.f32 %v463, 0.0
        %v491 = vmax.f32 %v465, 0.0
        %v492 = vmax.f32 %v468, 0.0
        %v493 = vmax.f32 %v470, 0.0
        %v494 = vmax.f32 %v473, 0.0
        %v495 = vmax.f32 %v475, 0.0
        %v496 = vmax.f32 %v478, 0.0
        %v497 = vmax.f32 %v480, 0.0
        %v498 = vpack.c.bf16 %v483, %v482
        %v499 = vpack.c.bf16 %v485, %v484
        %v500 = vpack.c.bf16 %v487, %v486
        %v501 = vpack.c.bf16 %v489, %v488
        %v502 = vpack.c.bf16 %v491, %v490
        %v503 = vpack.c.bf16 %v493, %v492
        %v504 = vpack.c.bf16 %v495, %v494
        %v505 = vpack.c.bf16 %v497, %v496
        %v506 = vld [vmem:[%s4] sm:$0xf]
        %v507 = vld [vmem:[%s4 + $0x4] sm:$0xf]
        %v508 = vld [vmem:[%s4 + $0x8] sm:$0xf]
        %v509 = vld [vmem:[%s4 + $0xc] sm:$0xf]
        %v510 = vld [vmem:[%s4 + $0x10] sm:$0xf]
        %v511 = vld [vmem:[%s4 + $0x14] sm:$0xf]
        %v512 = vld [vmem:[%s4 + $0x18] sm:$0xf]
        %v513 = vld [vmem:[%s4 + $0x1c] sm:$0xf]
        %v514 = vld [vmem:[%s5] sm:$0x1]
        %v516 = vperm.slane %v514, 0
        %v526 = vunpack.c.l.b16 %v506
        %v527 = vunpack.c.l.b16 %v507
        %v528 = vunpack.c.l.b16 %v508
        %v529 = vunpack.c.l.b16 %v509
        %v530 = vunpack.c.l.b16 %v510
        %v531 = vunpack.c.l.b16 %v511
        %v532 = vunpack.c.l.b16 %v512
        %v533 = vunpack.c.l.b16 %v513
        %v534 = vpack.c.b16 %v527, %v526
        %v535 = vpack.c.b16 %v529, %v528
        %v536 = vpack.c.b16 %v531, %v530
        %v537 = vpack.c.b16 %v533, %v532
        %vm542 = vcmask 523264
        %v544 = vsel %vm542, %v498, 0
        %v547 = vsel %vm542, %v499, 0
        %v550 = vsel %vm542, %v500, 0
        %v553 = vsel %vm542, %v501, 0
        %v556 = vsel %vm542, %v502, 0
        %v559 = vsel %vm542, %v503, 0
        %v562 = vsel %vm542, %v504, 0
        %v565 = vsel %vm542, %v505, 0
        %567 = vmatpush.bf16.msra.mxu0 0
        %568 = vmatpush.bf16.msra.mxu0 0
        %569 = vmatpush.bf16.msra.mxu0 0
        %570 = vmatpush.bf16.msra.mxu0 0
        %571 = vmatpush.bf16.msra.mxu0 %v537
        %572 = vmatpush.bf16.msra.mxu0 %v536
        %573 = vmatpush.bf16.msra.mxu0 %v535
        %574 = vmatpush.bf16.msra.mxu0 %v534
        %575 = vmatmul.bf16.gmra.mxu0 %v544
        %v576 = vpop.f32.mrf.mxu0
        %v577 = vadd.f32 %v516, %v576
        %v578 = vpop.f32.mrf.mxu0
        %v579 = vadd.f32 %v516, %v578
        %580 = vmatmul.bf16.gmra.mxu0 %v547
        %v581 = vpop.f32.mrf.mxu0
        %v582 = vadd.f32 %v516, %v581
        %v583 = vpop.f32.mrf.mxu0
        %v584 = vadd.f32 %v516, %v583
        %585 = vmatmul.bf16.gmra.mxu0 %v550
        %v586 = vpop.f32.mrf.mxu0
        %v587 = vadd.f32 %v516, %v586
        %v588 = vpop.f32.mrf.mxu0
        %v589 = vadd.f32 %v516, %v588
        %590 = vmatmul.bf16.gmra.mxu0 %v553
        %v591 = vpop.f32.mrf.mxu0
        %v592 = vadd.f32 %v516, %v591
        %v593 = vpop.f32.mrf.mxu0
        %v594 = vadd.f32 %v516, %v593
        %595 = vmatmul.bf16.gmra.mxu0 %v556
        %v596 = vpop.f32.mrf.mxu0
        %v597 = vadd.f32 %v516, %v596
        %v598 = vpop.f32.mrf.mxu0
        %v599 = vadd.f32 %v516, %v598
        %600 = vmatmul.bf16.gmra.mxu0 %v559
        %v601 = vpop.f32.mrf.mxu0
        %v602 = vadd.f32 %v516, %v601
        %v603 = vpop.f32.mrf.mxu0
        %v604 = vadd.f32 %v516, %v603
        %605 = vmatmul.bf16.gmra.mxu0 %v562
        %v606 = vpop.f32.mrf.mxu0
        %v607 = vadd.f32 %v516, %v606
        %v608 = vpop.f32.mrf.mxu0
        %v609 = vadd.f32 %v516, %v608
        %610 = vmatmul.bf16.gmra.mxu0 %v565
        %v611 = vpop.f32.mrf.mxu0
        %v612 = vadd.f32 %v516, %v611
        %v613 = vpop.f32.mrf.mxu0
        %v614 = vadd.f32 %v516, %v613
        %615 = vdwg.mxu0
        %v616 = vmax.f32 %v577, 0.0
        %v617 = vmax.f32 %v579, 0.0
        %v618 = vmax.f32 %v582, 0.0
        %v619 = vmax.f32 %v584, 0.0
        %v620 = vmax.f32 %v587, 0.0
        %v621 = vmax.f32 %v589, 0.0
        %v622 = vmax.f32 %v592, 0.0
        %v623 = vmax.f32 %v594, 0.0
        %v624 = vmax.f32 %v597, 0.0
        %v625 = vmax.f32 %v599, 0.0
        %v626 = vmax.f32 %v602, 0.0
        %v627 = vmax.f32 %v604, 0.0
        %v628 = vmax.f32 %v607, 0.0
        %v629 = vmax.f32 %v609, 0.0
        %v630 = vmax.f32 %v612, 0.0
        %v631 = vmax.f32 %v614, 0.0
        %v632 = vld [vmem:[%s330] sm:$0x1]
        %v633 = vlaneseq
        %v634 = vshrl.u32 %v633, 7
        %v635 = vperm.slane %v632, 0
        %vm636 = vcmp.eq.s32.totalorder %v635, %v634
        %v637 = vsel %vm636, 1, 0
        %v638 = vcvt.s32.f32 %v637
        %v639 = vpack.c.bf16 %v638, %v638
        %v640 = vld [vmem:[#allocation2] sm:$0xff]
        %v641 = vpack.c.bf16 %v617, %v616
        %v642 = vpack.c.bf16 %v619, %v618
        %v643 = vpack.c.bf16 %v621, %v620
        %v644 = vpack.c.bf16 %v623, %v622
        %v645 = vpack.c.bf16 %v625, %v624
        %v646 = vpack.c.bf16 %v627, %v626
        %v647 = vpack.c.bf16 %v629, %v628
        %v648 = vpack.c.bf16 %v631, %v630
        %649 = vmatpush.bf16.msra.mxu0 %v648
        %650 = vmatpush.bf16.msra.mxu0 %v647
        %651 = vmatpush.bf16.msra.mxu0 %v646
        %652 = vmatpush.bf16.msra.mxu0 %v645
        %653 = vmatpush.bf16.msra.mxu0 %v644
        %654 = vmatpush.bf16.msra.mxu0 %v643
        %655 = vmatpush.bf16.msra.mxu0 %v642
        %656 = vmatpush.bf16.msra.mxu0 %v641
        %657 = vmatmul.bf16.gmra.mxu0 %v639
        %v658 = vpop.f32.mrf.mxu0
        %v659 = vadd.f32 0.0, %v658
        %v660 = vpop.f32.mrf.mxu0
        %661 = vdwg.mxu0
        %v662 = vadd.f32 %v640, %v659
        %vm663 = vcmask 261120
        %664 = vst.msk [vmem:[#allocation2] sm:$0xff] %vm663, %v662
        %p665 = scmp.eq.s32.totalorder %s26, 1
        // Predicated region
        $region53: #{tpu_custom_call.1} parent=47 // pred_check
          %p666 = pneg %p665
        $region54: #{tpu_custom_call.1} parent=47 // pred_check_branch
          %668 = sbr.rel (%p666) target = $region56
        $region55: #{tpu_custom_call.1} parent=47 // pred_region
          %v669 = vld [vmem:[#allocation2] sm:$0xff]
          %v670 = vpack.c.bf16 %v669, %v669
          %v671 = vld [vmem:[%s6] sm:$0xf]
          %v672 = vld [vmem:[%s6 + $0x4] sm:$0xf]
          %v673 = vld [vmem:[%s6 + $0x8] sm:$0xf]
          %v674 = vld [vmem:[%s6 + $0xc] sm:$0xf]
          %v679 = vunpack.c.l.b16 %v671
          %v680 = vunpack.c.l.b16 %v672
          %v681 = vunpack.c.l.b16 %v673
          %v682 = vunpack.c.l.b16 %v674
          %v683 = vpack.c.b16 %v680, %v679
          %v684 = vpack.c.b16 %v682, %v681
          %v688 = vsel %vm663, %v670, 0
          %690 = vmatpush.bf16.msra.mxu0 0
          %691 = vmatpush.bf16.msra.mxu0 0
          %692 = vmatpush.bf16.msra.mxu0 0
          %693 = vmatpush.bf16.msra.mxu0 0
          %694 = vmatpush.bf16.msra.mxu0 0
          %695 = vmatpush.bf16.msra.mxu0 0
          %696 = vmatpush.bf16.msra.mxu0 %v684
          %697 = vmatpush.bf16.msra.mxu0 %v683
          %698 = vmatmul.bf16.gmra.mxu0 %v688
          %v699 = vpop.f32.mrf.mxu0
          %v700 = vadd.f32 0.0, %v699
          %v701 = vpop.f32.mrf.mxu0
          %702 = vdwg.mxu0
          %703 = vst [vmem:[%s315] sm:$0xff] %v700
        $region56: #{tpu_custom_call.1} parent=47 // pred_fallthru
          _
        %s704 = sand.u32 %s206, 1
        %s705 = scalar_lea.sflag [#allocation4], %s704
        %s706 = sand.u32 %s206, 1
        %s707 = smul.addr %s706, 8
        %s708 = scalar_lea.vmem [#allocation3], %s707
        // Predicated region
        $region57: #{tpu_custom_call.1} parent=47 // pred_check
          %p709 = pneg %p216
        $region58: #{tpu_custom_call.1} parent=47 // pred_check_branch
          %711 = sbr.rel (%p709) target = $region60
        $region59: #{tpu_custom_call.1} parent=47 // pred_region
          %713 = vsyncadd %s705, 0
          %s714 = smul.addr %s25, 8
          %s715 = scalar_lea.hbm %s7, %s714
          %s717 = sshll.u32 %s708, 4
          %s718 = int_to_ptr.vmem [resolvable:$true] %s717
          %s719 = sshll.u32 %s715, 4
          %s720 = int_to_ptr.hbm [resolvable:$true] %s719
          %722 = dma.vmem_to_hbm [thread:$0]  %s718, 128, %s720, %s705
        $region60: #{tpu_custom_call.1} parent=47 // pred_fallthru
          _
      $region48: #{tpu_custom_call.1} parent=5 // pred_fallthru
        _
      %p723 = scmp.le.s32.totalorder 2, %s16
      // Predicated region
      $region61: #{tpu_custom_call.1} parent=5 // pred_check
        %p724 = pneg %p723
      $region62: #{tpu_custom_call.1} parent=5 // pred_check_branch
        %726 = sbr.rel (%p724) target = $region64
      $region63: #{tpu_custom_call.1} parent=5 // pred_region
        %s727 = ssub.s32 %s16, 2
        // Predicated region
        $region65: #{tpu_custom_call.1} parent=63 // pred_check
          %p728 = pneg %p222
        $region66: #{tpu_custom_call.1} parent=63 // pred_check_branch
          %730 = sbr.rel (%p728) target = $region68
        $region67: #{tpu_custom_call.1} parent=63 // pred_region
          %s731 = sand.u32 %s207, 1
          %s732 = scalar_lea.sflag [#allocation4], %s731
          %s733 = sand.u32 %s207, 1
          %s734 = smul.addr %s733, 8
          %s735 = scalar_lea.vmem [#allocation3], %s734
          %737 = dma.done %s732, 128
        $region68: #{tpu_custom_call.1} parent=63 // pred_fallthru
          _
      $region64: #{tpu_custom_call.1} parent=5 // pred_fallthru
        _
    $region6: #{tpu_custom_call.1} parent=1 // loop_footer
      %s20 = sadd.s32 1, %s16
    $region7: #{tpu_custom_call.1} parent=1 // loop_footer_branch
      %15 = sbr.rel target = $region3
    $region8: #{tpu_custom_call.1} parent=1 // loop_exit
      _
    %738 = vsyncpa [#allocation4], 1
    %s739 = scalar_lea.sflag [#allocation4], 1
    %740 = vsyncpa %s739, 1

</llo_original>
